<compile_context>
chip_gen: v7x
topology: tpu7x:2x2x1
jax: 0.10.0
libtpu: 0.0.40
codegen_flags: <defaults>
</compile_context>

<pallas_src>
import functools

import numpy as np
import jax
import jax.numpy as jnp
from jax.experimental import pallas as pl
from jax.experimental.pallas import tpu as pltpu

_MIB = 1024 * 1024


def _channel_conv(w_ref, y, k):
    """k-tap 1-D conv (zero pad, no bias) along the channel axis of y:(bt,C,1) f32.

    Built from XLU rolls + iota masks of the tiny per-channel mean vector; these
    use the otherwise-idle XLU/VPU slots of this mem-bound kernel.
    """
    bt, C, _ = y.shape
    pad = (k - 1) // 2
    z = w_ref[pad] * y                                   # center tap
    if k > 1:
        c_idx = jax.lax.broadcasted_iota(jnp.int32, (bt, C, 1), 1)
        for j in range(k):
            off = j - pad
            if off == 0:
                continue
            # rolled[:, c, :] = y[:, (c + off) % C, :]
            rolled = pltpu.roll(y, shift=(-off) % C, axis=1)
            valid = (c_idx + off >= 0) & (c_idx + off < C)
            z = z + w_ref[j] * jnp.where(valid, rolled, 0.0)
    return z


def _eca_kernel(w_ref, x_ref, o_ref, *, hw, k):
    """Single-pass ECA: w_ref (k,) f32 SMEM; x_ref/o_ref (Bt, C, HW) VMEM."""
    # 1) Global average pool over spatial (== AdaptiveAvgPool2d(1)); the block
    #    last dim equals the logical HW so no padding garbage enters the sum.
    y = jnp.sum(x_ref[...], axis=2, keepdims=True, dtype=jnp.float32) * (1.0 / hw)
    # 2) k-tap 1-D conv along channels of the tiny mean vector.
    z = _channel_conv(w_ref, y, k)
    # 3) Broadcast multiply.  Re-read x_ref here (instead of reusing a Python
    #    value from step 1) so the multi-MiB tile is never nominally live
    #    across the whole kernel -> lower vreg pressure / no spills.
    o_ref[...] = (x_ref[...] * z.astype(x_ref.dtype)).astype(o_ref.dtype)


def _eca_pool_kernel(w_ref, x_ref, z_ref, acc_ref, *, hw, hw_tile, k):
    """Fallback pass 1: accumulate per-(B,C) sums over HW tiles, then conv."""
    t = pl.program_id(1)

    @pl.when(t == 0)
    def _():
        acc_ref[...] = jnp.zeros_like(acc_ref)

    # Mask lanes beyond the logical HW extent (last spatial tile may be partial
    # and its out-of-bounds lanes hold garbage).
    lane = jax.lax.broadcasted_iota(jnp.int32, x_ref.shape, 2)
    valid = (t * hw_tile + lane) < hw
    xs = jnp.where(valid, x_ref[...].astype(jnp.float32), 0.0)
    acc_ref[...] += jnp.sum(xs, axis=2, keepdims=True)

    @pl.when(t == pl.num_programs(1) - 1)
    def _():
        y = acc_ref[...] * (1.0 / hw)
        z_ref[...] = _channel_conv(w_ref, y, k)


def _eca_scale_kernel(x_ref, z_ref, o_ref):
    """Fallback pass 2: broadcast-multiply the per-channel attention."""
    o_ref[...] = (x_ref[...] * z_ref[...].astype(x_ref.dtype)).astype(o_ref.dtype)


def _tpu_geometry():
    """Returns (vmem_capacity_bytes or None, assumed TensorCores per chip)."""
    try:
        vmem = int(pltpu.get_tpu_info().vmem_capacity_bytes)
    except Exception:
        # Unknown hardware: size conservatively (v7x-safe everywhere).
        return None, 2
    # v7x: 64 MiB VMEM per TC, 2 TCs/chip.  v5e/v6e: 128 MiB VMEM, 1 TC/chip.
    return vmem, (2 if vmem <= 64 * _MIB else 1)


def eca_forward(x_nchw, conv_weight, *, force_spatial_tiling=False,
                _force_hw_tile=None):
    """ECA forward.  x_nchw: (B, C, H, W); conv_weight: (1, 1, k) nn.Conv1d weight."""
    B, C, H, W = x_nchw.shape
    k = int(conv_weight.shape[-1])
    HW = H * W
    dtype = x_nchw.dtype
    itemsize = jnp.dtype(dtype).itemsize

    # No wrapper pad/slice: keep the logical (B, C, HW) shape end-to-end.
    x = x_nchw.reshape(B, C, HW)
    w = conv_weight.reshape(k).astype(jnp.float32)

    vmem_cap, num_cores = _tpu_geometry()
    if vmem_cap is None or vmem_cap <= 64 * _MIB:
        # v7x-class (or unknown): keep 4x block bytes + headroom under ~56 MiB.
        block_budget = 12 * _MIB
        vmem_ceiling = 56 * _MIB
    else:
        # v5e / v6e: 128 MiB physical VMEM, single TensorCore.
        block_budget = 16 * _MIB
        vmem_ceiling = 96 * _MIB
    min_steps = 2 * num_cores      # >= 2 grid steps per TensorCore for pipelining

    bytes_per_batch = int(C * HW * itemsize)

    if bytes_per_batch <= block_budget and not force_spatial_tiling:
        # ---------------- single-pass path: whole (C, HW) slab per block -----
        bt = max(1, block_budget // bytes_per_batch)
        if B > min_steps:
            bt = min(bt, B // min_steps)   # keep the DMA pipeline (and both v7x TCs) fed
        bt = min(bt, B)
        grid = (pl.cdiv(B, bt),)           # Bt need not divide B; partial last block OK
        block_bytes = bt * bytes_per_batch
        vmem_limit = int(min(vmem_ceiling,
                             max(16 * _MIB, 4 * block_bytes + 8 * _MIB)))

        out = pl.pallas_call(
            functools.partial(_eca_kernel, hw=HW, k=k),
            out_shape=jax.ShapeDtypeStruct((B, C, HW), dtype),
            grid=grid,
            in_specs=[
                pl.BlockSpec(memory_space=pltpu.MemorySpace.SMEM),   # conv taps
                pl.BlockSpec((bt, C, HW), lambda b: (b, 0, 0)),
            ],
            out_specs=pl.BlockSpec((bt, C, HW), lambda b: (b, 0, 0)),
            compiler_params=pltpu.CompilerParams(
                dimension_semantics=("parallel",),
                vmem_limit_bytes=vmem_limit,
            ),
        )(w, x)
        return out.reshape(B, C, H, W)

    # ---------------- two-pass spatially-tiled fallback (large H*W) ----------
    if _force_hw_tile is not None:
        hw_tile = int(_force_hw_tile)
    else:
        hw_tile = max(128, (block_budget // (C * itemsize)) // 128 * 128)
        hw_tile = min(hw_tile, ((HW + 127) // 128) * 128)
    n_hw = pl.cdiv(HW, hw_tile)
    block_bytes = int(C * hw_tile * itemsize)
    vmem_limit = int(min(vmem_ceiling, max(16 * _MIB, 4 * block_bytes + 8 * _MIB)))
    # TODO(synk): sweep pipeline_mode=pl.Buffered(3) on the x input here when
    # there is VMEM headroom -- this path is purely DMA-bound.

    # Pass 1: per-(B, C) mean over spatial tiles + tiny channel conv -> z (f32).
    z = pl.pallas_call(
        functools.partial(_eca_pool_kernel, hw=HW, hw_tile=hw_tile, k=k),
        out_shape=jax.ShapeDtypeStruct((B, C, 1), jnp.float32),
        grid=(B, n_hw),
        in_specs=[
            pl.BlockSpec(memory_space=pltpu.MemorySpace.SMEM),
            pl.BlockSpec((1, C, hw_tile), lambda b, t: (b, 0, t)),
        ],
        out_specs=pl.BlockSpec((1, C, 1), lambda b, t: (b, 0, 0)),
        scratch_shapes=[pltpu.VMEM((1, C, 1), jnp.float32)],
        compiler_params=pltpu.CompilerParams(
            dimension_semantics=("parallel", "arbitrary"),
            vmem_limit_bytes=vmem_limit,
        ),
    )(w, x)

    # Pass 2: broadcast-multiply the per-channel attention over spatial tiles.
    out = pl.pallas_call(
        _eca_scale_kernel,
        out_shape=jax.ShapeDtypeStruct((B, C, HW), dtype),
        grid=(B, n_hw),
        in_specs=[
            pl.BlockSpec((1, C, hw_tile), lambda b, t: (b, 0, t)),
            pl.BlockSpec((1, C, 1), lambda b, t: (b, 0, 0)),
        ],
        out_specs=pl.BlockSpec((1, C, hw_tile), lambda b, t: (b, 0, t)),
        compiler_params=pltpu.CompilerParams(
            dimension_semantics=("parallel", "parallel"),
            vmem_limit_bytes=vmem_limit,
        ),
    )(x, z)
    return out.reshape(B, C, H, W)


if __name__ == "__main__":
    # Shapes consistent with the CNN: ECA(32) -> C = 32, kernel_size = 3.
    C = 32
    b_hp, gamma = 1, 2
    t = int(abs((np.log2(C) + b_hp) / gamma))
    kernel_size = t if t % 2 else t + 1          # always odd
    pad = (kernel_size - 1) // 2

    key = jax.random.PRNGKey(0)
    kx, kw, kx2, kx3 = jax.random.split(key, 4)
    bound = 1.0 / np.sqrt(kernel_size)           # PyTorch Conv1d default init range
    w = jax.random.uniform(kw, (1, 1, kernel_size), jnp.float32, -bound, bound)

    def eca_ref(xin, win):
        kk = win.shape[-1]
        p = (kk - 1) // 2
        cc = xin.shape[1]
        y = jnp.mean(xin.astype(jnp.float32), axis=(2, 3))          # (B, C)
        y_pad = jnp.pad(y, ((0, 0), (p, p)))
        zc = sum(win[0, 0, j] * y_pad[:, j:j + cc] for j in range(kk))
        return xin.astype(jnp.float32) * zc[:, :, None, None]

    # 1) f32, HW = 120 (not a multiple of 128 -> exercises the no-pad masked tail).
    x = jax.random.normal(kx, (2, C, 12, 10), dtype=jnp.float32)
    out = jax.block_until_ready(eca_forward(x, w))
    np.testing.assert_allclose(np.asarray(out), np.asarray(eca_ref(x, w)),
                               atol=1e-5, rtol=1e-5)

    # 2) bf16 I/O, B = 5 (batch tile need not divide B -> partial last block).
    x16 = jax.random.normal(kx2, (5, C, 4, 8), jnp.float32).astype(jnp.bfloat16)
    out16 = jax.block_until_ready(eca_forward(x16, w))
    np.testing.assert_allclose(np.asarray(out16.astype(jnp.float32)),
                               np.asarray(eca_ref(x16, w)), atol=5e-2, rtol=5e-2)

    # 3) Two-pass spatially-tiled fallback (forced; HW = 272 over three 128-wide
    #    tiles including a partial one, so the masked reduction is exercised).
    x3 = jax.random.normal(kx3, (3, C, 16, 17), dtype=jnp.float32)
    out3 = jax.block_until_ready(
        eca_forward(x3, w, force_spatial_tiling=True, _force_hw_tile=128))
    np.testing.assert_allclose(np.asarray(out3), np.asarray(eca_ref(x3, w)),
                               atol=1e-5, rtol=1e-5)

    print("KERNEL_OK")
</pallas_src>

<mosaic_0001>
module attributes {stable_mosaic.version = 11 : i64} {
  func.func @_eca_kernel(%arg0: i32, %arg1: memref<3xf32, #tpu.memory_space<smem>>, %arg2: memref<2x32x120xf32, #tpu.memory_space<vmem>>, %arg3: memref<2x32x120xf32, #tpu.memory_space<vmem>>) attributes {dimension_semantics = [#tpu.dimension_semantics<parallel>], iteration_bounds = array<i64: 1>, scalar_prefetch = 0 : i64, scratch_operands = 0 : i64, tpu.core_type = #tpu.core_type<tc>, window_params = [{transform_indices = @transform_0, window_bounds = array<i64: 3>}, {transform_indices = @transform_1, window_bounds = array<i64: 2, 32, 120>}, {transform_indices = @transform_2, window_bounds = array<i64: 2, 32, 120>}]} {
    %c0 = arith.constant 0 : index
    %c0_0 = arith.constant 0 : index
    %c0_1 = arith.constant 0 : index
    %0 = vector.load %arg2[%c0, %c0_0, %c0_1] : memref<2x32x120xf32, #tpu.memory_space<vmem>>, vector<2x32x120xf32>
    %cst = arith.constant dense<0.000000e+00> : vector<2x32xf32>
    %1 = vector.multi_reduction <add>, %0, %cst [2] : vector<2x32x120xf32> to vector<2x32xf32>
    %2 = vector.shape_cast %1 : vector<2x32xf32> to vector<2x32x1xf32>
    %cst_2 = arith.constant 0.00833333377 : f32
    %3 = vector.broadcast %cst_2 : f32 to vector<2x32x1xf32>
    %4 = arith.mulf %2, %3 : vector<2x32x1xf32>
    %c1 = arith.constant 1 : index
    %5 = memref.load %arg1[%c1] : memref<3xf32, #tpu.memory_space<smem>>
    %6 = vector.broadcast %5 : f32 to vector<2x32x1xf32>
    %7 = arith.mulf %6, %4 : vector<2x32x1xf32>
    %8 = tpu.iota {dimensions = array<i32: 1>} : vector<2x32x1xi32>
    %c1_i32 = arith.constant 1 : i32
    %9 = tpu.dynamic_rotate %4 by %c1_i32 dim 1 : vector<2x32x1xf32>, i32 -> vector<2x32x1xf32>
    %c-1_i32 = arith.constant -1 : i32
    %10 = vector.broadcast %c-1_i32 : i32 to vector<2x32x1xi32>
    %11 = arith.addi %8, %10 : vector<2x32x1xi32>
    %c0_i32 = arith.constant 0 : i32
    %12 = vector.broadcast %c0_i32 : i32 to vector<2x32x1xi32>
    %13 = arith.cmpi sge, %11, %12 : vector<2x32x1xi32>
    %c-1_i32_3 = arith.constant -1 : i32
    %14 = vector.broadcast %c-1_i32_3 : i32 to vector<2x32x1xi32>
    %15 = arith.addi %8, %14 : vector<2x32x1xi32>
    %c32_i32 = arith.constant 32 : i32
    %16 = vector.broadcast %c32_i32 : i32 to vector<2x32x1xi32>
    %17 = arith.cmpi slt, %15, %16 : vector<2x32x1xi32>
    %18 = arith.andi %13, %17 : vector<2x32x1xi1>
    %c0_4 = arith.constant 0 : index
    %19 = memref.load %arg1[%c0_4] : memref<3xf32, #tpu.memory_space<smem>>
    %cst_5 = arith.constant 0.000000e+00 : f32
    %20 = vector.broadcast %cst_5 : f32 to vector<2x32x1xf32>
    %21 = arith.select %18, %9, %20 : vector<2x32x1xi1>, vector<2x32x1xf32>
    %22 = vector.broadcast %19 : f32 to vector<2x32x1xf32>
    %23 = arith.mulf %22, %21 : vector<2x32x1xf32>
    %24 = arith.addf %7, %23 : vector<2x32x1xf32>
    %c31_i32 = arith.constant 31 : i32
    %25 = tpu.dynamic_rotate %4 by %c31_i32 dim 1 : vector<2x32x1xf32>, i32 -> vector<2x32x1xf32>
    %c1_i32_6 = arith.constant 1 : i32
    %26 = vector.broadcast %c1_i32_6 : i32 to vector<2x32x1xi32>
    %27 = arith.addi %8, %26 : vector<2x32x1xi32>
    %c0_i32_7 = arith.constant 0 : i32
    %28 = vector.broadcast %c0_i32_7 : i32 to vector<2x32x1xi32>
    %29 = arith.cmpi sge, %27, %28 : vector<2x32x1xi32>
    %c1_i32_8 = arith.constant 1 : i32
    %30 = vector.broadcast %c1_i32_8 : i32 to vector<2x32x1xi32>
    %31 = arith.addi %8, %30 : vector<2x32x1xi32>
    %c32_i32_9 = arith.constant 32 : i32
    %32 = vector.broadcast %c32_i32_9 : i32 to vector<2x32x1xi32>
    %33 = arith.cmpi slt, %31, %32 : vector<2x32x1xi32>
    %34 = arith.andi %29, %33 : vector<2x32x1xi1>
    %c2 = arith.constant 2 : index
    %35 = memref.load %arg1[%c2] : memref<3xf32, #tpu.memory_space<smem>>
    %cst_10 = arith.constant 0.000000e+00 : f32
    %36 = vector.broadcast %cst_10 : f32 to vector<2x32x1xf32>
    %37 = arith.select %34, %25, %36 : vector<2x32x1xi1>, vector<2x32x1xf32>
    %38 = vector.broadcast %35 : f32 to vector<2x32x1xf32>
    %39 = arith.mulf %38, %37 : vector<2x32x1xf32>
    %40 = arith.addf %24, %39 : vector<2x32x1xf32>
    %c0_11 = arith.constant 0 : index
    %c0_12 = arith.constant 0 : index
    %c0_13 = arith.constant 0 : index
    %41 = vector.load %arg2[%c0_11, %c0_12, %c0_13] : memref<2x32x120xf32, #tpu.memory_space<vmem>>, vector<2x32x120xf32>
    %42 = vector.broadcast %40 : vector<2x32x1xf32> to vector<2x32x120xf32>
    %43 = arith.mulf %41, %42 : vector<2x32x120xf32>
    %c0_14 = arith.constant 0 : index
    %c0_15 = arith.constant 0 : index
    %c0_16 = arith.constant 0 : index
    %44 = vector.load %arg3[%c0_14, %c0_15, %c0_16] : memref<2x32x120xf32, #tpu.memory_space<vmem>>, vector<2x32x120xf32>
    tpu.vector_store %arg3[%c0_14, %c0_15, %c0_16], %43 {strides = array<i32>} : memref<2x32x120xf32, #tpu.memory_space<vmem>>, vector<2x32x120xf32>,
    return
  }
  func.func @transform_0(%arg0: i32) -> i32 {
    %c0_i32 = arith.constant 0 : i32
    %c0_i32_0 = arith.constant 0 : i32
    return %c0_i32 : i32
  }
  func.func @transform_1(%arg0: i32) -> (i32, i32, i32) {
    %c0_i32 = arith.constant 0 : i32
    %c0_i32_0 = arith.constant 0 : i32
    %c0_i32_1 = arith.constant 0 : i32
    return %arg0, %c0_i32, %c0_i32_0 : i32, i32, i32
  }
  func.func @transform_2(%arg0: i32) -> (i32, i32, i32) {
    %c0_i32 = arith.constant 0 : i32
    %c0_i32_0 = arith.constant 0 : i32
    %c0_i32_1 = arith.constant 0 : i32
    return %arg0, %c0_i32, %c0_i32_0 : i32, i32, i32
  }
}

</mosaic_0001>

<llo_original>
// kernel: tpu_custom_call.1
$region0: #{tpu_custom_call.1}
  #allocation0 [shape = 'u32[]', space=smem, size = 0x4, offset = 0x4, fixed_abs, tag = 'smem constant byte address 0x4 - core index']
  #allocation1 [shape = 'u32[144,128]{1,0:T(1,128)}', space=vmem, size = 0x12000, scoped, tag = 'internal scratch']
  %s0 = inlined_call_operand.hbm [shape: f32[3], index: 0, kind: input, shape index: {}]
  %s1 = inlined_call_operand.hbm [shape: f32[2,32,120], index: 1, kind: input, shape index: {}]
  %s2 = inlined_call_operand.hbm [shape: f32[2,32,120], index: 2, kind: output, shape index: {}]
  %s3 = sld [smem:[#allocation0]]
  $region26: #{tpu_custom_call.1} parent=0
    _
  %s5 = ssub.s32 1, %s3
  %s6 = scalar_select 0, %s5, %s3
  $region1: #{tpu_custom_call.1} parent=0
    #allocation2 [shape = 'u8[512]{0}', space=smem, size = 0x200, scoped, tag = 'input window, operand 0, single buffered']
    #allocation3 [shape = 's32[1]{0}', space=sflag, size = 0x4, scoped, tag = 'scoped memory for tpu_custom_call.1']
    #allocation4 [shape = 's32[1]{0}', space=sflag, size = 0x4, scoped, tag = 'scoped memory for tpu_custom_call.1']
    #allocation5 [shape = 's32[1]{0}', space=sflag, size = 0x4, scoped, tag = 'scoped memory for tpu_custom_call.1']
    #allocation6 [shape = 'u8[32768]{0}', space=vmem, size = 0x8000, scoped, tag = 'input window, operand 1, single buffered']
    #allocation7 [shape = 'u8[32768]{0}', space=vmem, size = 0x8000, scoped, tag = 'output window, operand 0, single buffered']
    %7 = vsyncpa [#allocation5], 0
    %8 = vsyncpa [#allocation3], 0
    %9 = vsyncpa [#allocation4], 0
    // Predicated region
    $region2: #{tpu_custom_call.1} parent=1 // pred_check
      _
    $region3: #{tpu_custom_call.1} parent=1 // pred_check_branch
      %11 = sbr.rel (0) target = $region5
    $region4: #{tpu_custom_call.1} parent=1 // pred_region
      %s13 = ssub.s32 16, 16
      %14 = vsyncadd [#allocation5], %s13
      %17 = dma.hbm_to_smem %s0, 16, [#allocation2], [#allocation5]
    $region5: #{tpu_custom_call.1} parent=1 // pred_fallthru
      _
    // Predicated region
    $region6: #{tpu_custom_call.1} parent=1 // pred_check
      _
    $region7: #{tpu_custom_call.1} parent=1 // pred_check_branch
      %19 = sbr.rel (0) target = $region9
    $region8: #{tpu_custom_call.1} parent=1 // pred_region
      %s21 = ssub.s32 1024, 1024
      %22 = vsyncadd [#allocation3], %s21
      %s23 = sshll.u32 [#allocation6], 4
      %s24 = int_to_ptr.vmem [resolvable:$true] %s23
      %29 = dma.hbm_to_vmem [thread:$0]  %s1, 1024, %s24, [#allocation3], 128, 128, 8
    $region9: #{tpu_custom_call.1} parent=1 // pred_fallthru
      _
    // Predicated region
    $region10: #{tpu_custom_call.1} parent=1 // pred_check
      _
    $region11: #{tpu_custom_call.1} parent=1 // pred_check_branch
      %31 = sbr.rel (0) target = $region13
    $region12: #{tpu_custom_call.1} parent=1 // pred_region
      %32 = dma.done [#allocation5], 16
    $region13: #{tpu_custom_call.1} parent=1 // pred_fallthru
      _
    // Predicated region
    $region14: #{tpu_custom_call.1} parent=1 // pred_check
      _
    $region15: #{tpu_custom_call.1} parent=1 // pred_check_branch
      %34 = sbr.rel (0) target = $region17
    $region16: #{tpu_custom_call.1} parent=1 // pred_region
      %35 = dma.done [#allocation3], 1024
    $region17: #{tpu_custom_call.1} parent=1 // pred_fallthru
      _
    %36 = sfence
    %v37 = vld [vmem:[#allocation6] sm:$0xff]
    %v38 = vld [vmem:[#allocation6 + $0x8] sm:$0xff]
    %v39 = vld [vmem:[#allocation6 + $0x10] sm:$0xff]
    %v40 = vld [vmem:[#allocation6 + $0x18] sm:$0xff]
    %v41 = vld [vmem:[#allocation6 + $0x20] sm:$0xff]
    %v42 = vld [vmem:[#allocation6 + $0x28] sm:$0xff]
    %v43 = vld [vmem:[#allocation6 + $0x30] sm:$0xff]
    %v44 = vld [vmem:[#allocation6 + $0x38] sm:$0xff]
    %vm45 = vcmask 982016
    %v46 = vsel %vm45, %v37, 0.0
    %47 = vadd.xlane.f32.xlu0 %v46
    %v48 = vpop.xlane.xlu0 %47
    %v49 = vsel %vm45, %v38, 0.0
    %50 = vadd.xlane.f32.xlu0 %v49
    %v51 = vpop.xlane.xlu0 %50
    %v52 = vsel %vm45, %v39, 0.0
    %53 = vadd.xlane.f32.xlu0 %v52
    %v54 = vpop.xlane.xlu0 %53
    %v55 = vsel %vm45, %v40, 0.0
    %56 = vadd.xlane.f32.xlu0 %v55
    %v57 = vpop.xlane.xlu0 %56
    %v58 = vsel %vm45, %v41, 0.0
    %59 = vadd.xlane.f32.xlu0 %v58
    %v60 = vpop.xlane.xlu0 %59
    %v61 = vsel %vm45, %v42, 0.0
    %62 = vadd.xlane.f32.xlu0 %v61
    %v63 = vpop.xlane.xlu0 %62
    %v64 = vsel %vm45, %v43, 0.0
    %65 = vadd.xlane.f32.xlu0 %v64
    %v66 = vpop.xlane.xlu0 %65
    %v67 = vsel %vm45, %v44, 0.0
    %68 = vadd.xlane.f32.xlu0 %v67
    %v69 = vpop.xlane.xlu0 %68
    %v70 = vmul.f32 %v48, 0.008333334
    %v71 = vmul.f32 %v51, 0.008333334
    %v72 = vmul.f32 %v54, 0.008333334
    %v73 = vmul.f32 %v57, 0.008333334
    %v74 = vmul.f32 %v60, 0.008333334
    %v75 = vmul.f32 %v63, 0.008333334
    %v76 = vmul.f32 %v66, 0.008333334
    %v77 = vmul.f32 %v69, 0.008333334
    %s78 = sld [smem:[#allocation2 + $0x1]]
    %v79 = vstv %s78
    %v80 = vmul.f32 %v79, %v70
    %v81 = vmul.f32 %v79, %v71
    %v82 = vmul.f32 %v79, %v72
    %v83 = vmul.f32 %v79, %v73
    %v84 = vmul.f32 %v79, %v74
    %v85 = vmul.f32 %v79, %v75
    %v86 = vmul.f32 %v79, %v76
    %v87 = vmul.f32 %v79, %v77
    %v88 = vlaneseq
    %v89 = vshrl.u32 %v88, 7
    %v90 = vadd.s32 %v89, 8
    %v91 = vadd.s32 %v89, 16
    %v92 = vadd.s32 %v89, 24
    %v93 = vrot.slane %v70, 7
    %v94 = vrot.slane %v74, 7
    %v95 = vrot.slane %v71, 7
    %v96 = vrot.slane %v75, 7
    %v97 = vrot.slane %v72, 7
    %v98 = vrot.slane %v76, 7
    %v99 = vrot.slane %v73, 7
    %v100 = vrot.slane %v77, 7
    %vm101 = vcmp.lt.s32.totalorder %v89, 1
    %v102 = vsel %vm101, %v97, %v99
    %v103 = vsel %vm101, %v98, %v100
    %v104 = vsel %vm101, %v95, %v97
    %v105 = vsel %vm101, %v96, %v98
    %v106 = vsel %vm101, %v93, %v95
    %v107 = vsel %vm101, %v94, %v96
    %v108 = vsel %vm101, %v99, %v93
    %v109 = vsel %vm101, %v100, %v94
    %v110 = vadd.s32 %v89, 4294967295
    %v111 = vadd.s32 %v90, 4294967295
    %v112 = vadd.s32 %v91, 4294967295
    %v113 = vadd.s32 %v92, 4294967295
    %vm114 = vcmp.ge.s32.totalorder %v110, 0
    %vm115 = vcmp.ge.s32.totalorder %v111, 0
    %vm116 = vcmp.ge.s32.totalorder %v112, 0
    %vm117 = vcmp.ge.s32.totalorder %v113, 0
    %vm118 = vcmp.lt.s32.totalorder %v110, 32
    %vm119 = vcmp.lt.s32.totalorder %v111, 32
    %vm120 = vcmp.lt.s32.totalorder %v112, 32
    %vm121 = vcmp.lt.s32.totalorder %v113, 32
    %vm122 = vmand %vm114, %vm118
    %vm123 = vmand %vm115, %vm119
    %vm124 = vmand %vm116, %vm120
    %vm125 = vmand %vm117, %vm121
    %s126 = sld [smem:[#allocation2]]
    %v127 = vsel %vm122, %v108, 0.0
    %v128 = vsel %vm123, %v106, 0.0
    %v129 = vsel %vm124, %v104, 0.0
    %v130 = vsel %vm125, %v102, 0.0
    %v131 = vsel %vm122, %v109, 0.0
    %v132 = vsel %vm123, %v107, 0.0
    %v133 = vsel %vm124, %v105, 0.0
    %v134 = vsel %vm125, %v103, 0.0
    %v135 = vstv %s126
    %v136 = vmul.f32 %v135, %v127
    %v137 = vmul.f32 %v135, %v128
    %v138 = vmul.f32 %v135, %v129
    %v139 = vmul.f32 %v135, %v130
    %v140 = vmul.f32 %v135, %v131
    %v141 = vmul.f32 %v135, %v132
    %v142 = vmul.f32 %v135, %v133
    %v143 = vmul.f32 %v135, %v134
    %v144 = vadd.f32 %v80, %v136
    %v145 = vadd.f32 %v81, %v137
    %v146 = vadd.f32 %v82, %v138
    %v147 = vadd.f32 %v83, %v139
    %v148 = vadd.f32 %v84, %v140
    %v149 = vadd.f32 %v85, %v141
    %v150 = vadd.f32 %v86, %v142
    %v151 = vadd.f32 %v87, %v143
    %v152 = vrot.slane %v70, 1
    %v153 = vrot.slane %v74, 1
    %v154 = vrot.slane %v71, 1
    %v155 = vrot.slane %v75, 1
    %v156 = vrot.slane %v72, 1
    %v157 = vrot.slane %v76, 1
    %v158 = vrot.slane %v73, 1
    %v159 = vrot.slane %v77, 1
    %vm160 = vcmp.lt.s32.totalorder %v89, 7
    %v161 = vsel %vm160, %v156, %v158
    %v162 = vsel %vm160, %v157, %v159
    %v163 = vsel %vm160, %v154, %v156
    %v164 = vsel %vm160, %v155, %v157
    %v165 = vsel %vm160, %v152, %v154
    %v166 = vsel %vm160, %v153, %v155
    %v167 = vsel %vm160, %v158, %v152
    %v168 = vsel %vm160, %v159, %v153
    %v169 = vadd.s32 %v89, 1
    %v170 = vadd.s32 %v90, 1
    %v171 = vadd.s32 %v91, 1
    %v172 = vadd.s32 %v92, 1
    %vm173 = vcmp.ge.s32.totalorder %v169, 0
    %vm174 = vcmp.ge.s32.totalorder %v170, 0
    %vm175 = vcmp.ge.s32.totalorder %v171, 0
    %vm176 = vcmp.ge.s32.totalorder %v172, 0
    %vm177 = vcmp.lt.s32.totalorder %v169, 32
    %vm178 = vcmp.lt.s32.totalorder %v170, 32
    %vm179 = vcmp.lt.s32.totalorder %v171, 32
    %vm180 = vcmp.lt.s32.totalorder %v172, 32
    %vm181 = vmand %vm173, %vm177
    %vm182 = vmand %vm174, %vm178
    %vm183 = vmand %vm175, %vm179
    %vm184 = vmand %vm176, %vm180
    %s185 = sld [smem:[#allocation2 + $0x2]]
    %v186 = vsel %vm181, %v165, 0.0
    %v187 = vsel %vm182, %v163, 0.0
    %v188 = vsel %vm183, %v161, 0.0
    %v189 = vsel %vm184, %v167, 0.0
    %v190 = vsel %vm181, %v166, 0.0
    %v191 = vsel %vm182, %v164, 0.0
    %v192 = vsel %vm183, %v162, 0.0
    %v193 = vsel %vm184, %v168, 0.0
    %v194 = vstv %s185
    %v195 = vmul.f32 %v194, %v186
    %v196 = vmul.f32 %v194, %v187
    %v197 = vmul.f32 %v194, %v188
    %v198 = vmul.f32 %v194, %v189
    %v199 = vmul.f32 %v194, %v190
    %v200 = vmul.f32 %v194, %v191
    %v201 = vmul.f32 %v194, %v192
    %v202 = vmul.f32 %v194, %v193
    %v203 = vadd.f32 %v144, %v195
    %v204 = vadd.f32 %v145, %v196
    %v205 = vadd.f32 %v146, %v197
    %v206 = vadd.f32 %v147, %v198
    %v207 = vadd.f32 %v148, %v199
    %v208 = vadd.f32 %v149, %v200
    %v209 = vadd.f32 %v150, %v201
    %v210 = vadd.f32 %v151, %v202
    %212 = vset.pattern.permute.xlu0 0
    %213 = vperm.xlu0 %212, %v203
    %v214 = vpop.permute.xlu0 %213
    %217 = vset.pattern.permute.xlu0 0
    %218 = vperm.xlu0 %217, %v204
    %v219 = vpop.permute.xlu0 %218
    %222 = vset.pattern.permute.xlu0 0
    %223 = vperm.xlu0 %222, %v205
    %v224 = vpop.permute.xlu0 %223
    %227 = vset.pattern.permute.xlu0 0
    %228 = vperm.xlu0 %227, %v206
    %v229 = vpop.permute.xlu0 %228
    %232 = vset.pattern.permute.xlu0 0
    %233 = vperm.xlu0 %232, %v207
    %v234 = vpop.permute.xlu0 %233
    %237 = vset.pattern.permute.xlu0 0
    %238 = vperm.xlu0 %237, %v208
    %v239 = vpop.permute.xlu0 %238
    %242 = vset.pattern.permute.xlu0 0
    %243 = vperm.xlu0 %242, %v209
    %v244 = vpop.permute.xlu0 %243
    %247 = vset.pattern.permute.xlu0 0
    %248 = vperm.xlu0 %247, %v210
    %v249 = vpop.permute.xlu0 %248
    %v251 = vmul.f32 %v37, %v214
    %v252 = vmul.f32 %v38, %v219
    %v253 = vmul.f32 %v39, %v224
    %v254 = vmul.f32 %v40, %v229
    %v255 = vmul.f32 %v41, %v234
    %v256 = vmul.f32 %v42, %v239
    %v257 = vmul.f32 %v43, %v244
    %v258 = vmul.f32 %v44, %v249
    %259 = vst.msk [vmem:[#allocation7] sm:$0xff] %vm45, %v251
    %260 = vst.msk [vmem:[#allocation7 + $0x8] sm:$0xff] %vm45, %v252
    %261 = vst.msk [vmem:[#allocation7 + $0x10] sm:$0xff] %vm45, %v253
    %262 = vst.msk [vmem:[#allocation7 + $0x18] sm:$0xff] %vm45, %v254
    %263 = vst.msk [vmem:[#allocation7 + $0x20] sm:$0xff] %vm45, %v255
    %264 = vst.msk [vmem:[#allocation7 + $0x28] sm:$0xff] %vm45, %v256
    %265 = vst.msk [vmem:[#allocation7 + $0x30] sm:$0xff] %vm45, %v257
    %266 = vst.msk [vmem:[#allocation7 + $0x38] sm:$0xff] %vm45, %v258
    // Predicated region
    $region18: #{tpu_custom_call.1} parent=1 // pred_check
      _
    $region19: #{tpu_custom_call.1} parent=1 // pred_check_branch
      %268 = sbr.rel (0) target = $region21
    $region20: #{tpu_custom_call.1} parent=1 // pred_region
      %s270 = ssub.s32 1024, 1024
      %271 = vsyncadd [#allocation4], %s270
      %s272 = sshll.u32 [#allocation7], 4
      %s273 = int_to_ptr.vmem [resolvable:$true] %s272
      %278 = dma.vmem_to_hbm [thread:$0]  %s273, 1024, %s2, [#allocation4], 128, 128, 8
    $region21: #{tpu_custom_call.1} parent=1 // pred_fallthru
      _
    // Predicated region
    $region22: #{tpu_custom_call.1} parent=1 // pred_check
      _
    $region23: #{tpu_custom_call.1} parent=1 // pred_check_branch
      %280 = sbr.rel (0) target = $region25
    $region24: #{tpu_custom_call.1} parent=1 // pred_region
      %281 = dma.done [#allocation4], 1024
    $region25: #{tpu_custom_call.1} parent=1 // pred_fallthru
      _
    %282 = vsyncpa [#allocation3], 1
    %283 = vsyncpa [#allocation4], 1
    %284 = vsyncpa [#allocation5], 1

</llo_original>
